<compile_context>
chip_gen: v7x
topology: tpu7x:2x2x1
jax: 0.10.0
libtpu: 0.0.40
codegen_flags: <defaults>
</compile_context>

<pallas_src>
import functools

import jax
import jax.numpy as jnp
from jax.experimental import pallas as pl
from jax.experimental.pallas import tpu as pltpu


# ----------------------------------------------------------------------------- helpers
def _round_up(x, m):
    return ((x + m - 1) // m) * m


def _cdiv(a, b):
    return -(-a // b)


def _tpu_hw():
    """(vmem_capacity_bytes, tensorcores_per_chip) with conservative fallbacks."""
    vmem_cap = 64 * 1024 * 1024          # v7x has the smallest VMEM -> safe default
    num_cores = 1                        # v5e/v6e: 1 TC per chip
    try:
        info = pltpu.get_tpu_info()
        vmem_cap = int(getattr(info, "vmem_capacity_bytes", vmem_cap))
        for attr in ("num_cores", "tensorcore_count", "core_count"):
            v = getattr(info, attr, None)
            if v:
                num_cores = int(v)
                break
    except Exception:
        pass
    return vmem_cap, max(1, num_cores)


def _tile_footprint(tm, tk, tn, k_tiles, n_tiles, x_isz, w_isz, o_isz):
    """VMEM bytes for one grid step (double-buffered inputs/outputs + scratch)."""
    w_bufs = 1 if (k_tiles == 1 and n_tiles == 1) else 2
    fx = 2 * tm * tk * x_isz            # x row tile (double-buffered)
    fw = w_bufs * tk * tn * w_isz       # weight tile (resident or streamed)
    fb = 2 * 8 * tn * 4                 # bias tile, f32, sublane-padded
    fo = 2 * tm * tn * o_isz            # output tile (double-buffered)
    fa = tm * tn * 4                    # f32 accumulator scratch
    return fx + fw + fb + fo + fa


def _make_plan(nf, T, *, x_itemsize, w_itemsize, out_itemsize, max_tile_bytes=None):
    """Capacity-aware (tk, tn) tiling plan; independent of M (row tiling is per-call)."""
    vmem_cap, num_cores = _tpu_hw()
    budget = int(max_tile_bytes) if max_tile_bytes is not None else int(vmem_cap * 0.6)
    tm_budget = 256                                  # per-call tm is capped at 256
    Tp0 = _round_up(T, 128)                          # lane-dense output columns

    tn_cands = sorted({min(Tp0, c) for c in (Tp0, 2048, 1024, 512, 256, 128)},
                      reverse=True)
    tk_cands = [nf] + [c for c in (4096, 2048, 1024, 512, 256, 128) if c < nf]

    tk = tn = None
    for tk_c in tk_cands:                            # prefer un-tiled K (weight read once)
        for tn_c in tn_cands:                        # then the widest lane-dense column tile
            k_t = _cdiv(nf, tk_c)
            n_t = _cdiv(Tp0, tn_c)
            if _tile_footprint(tm_budget, tk_c, tn_c, k_t, n_t,
                               x_itemsize, w_itemsize, out_itemsize) <= budget:
                tk, tn = tk_c, tn_c
                break
        if tk is not None:
            break
    if tk is None:                                   # nothing fits the budget -> minimal tiles
        tk, tn = min(nf, 128), 128

    k_tiles = _cdiv(nf, tk)
    n_tiles = _cdiv(Tp0, tn)

    # Multi-TensorCore chips (v7x): split the column axis so each core reads a
    # disjoint slice of the weight instead of duplicating the whole weight DMA.
    if num_cores > 1 and n_tiles < num_cores and Tp0 >= 128 * num_cores:
        tn = _round_up(_cdiv(Tp0, num_cores), 128)
        n_tiles = _cdiv(Tp0, tn)

    return dict(tk=tk, tn=tn, k_tiles=k_tiles, n_tiles=n_tiles,
                nf_pad=k_tiles * tk, Tp=n_tiles * tn,
                tm_cap=tm_budget, vmem_cap=vmem_cap)


# ----------------------------------------------------------------------------- kernel
def _flatten_head_kernel(x_ref, w_ref, b_ref, o_ref, acc_ref, *, compute_dtype):
    # x_ref: (tm, tk)  w_ref: (tk, tn) [compute_dtype]  b_ref: (1, tn) f32
    # o_ref: (tm, tn)  acc_ref: (tm, tn) f32
    k = pl.program_id(2)

    @pl.when(k == 0)
    def _init():
        acc_ref[...] = jnp.zeros_like(acc_ref)

    a = x_ref[...].astype(compute_dtype)             # bf16 operands for the MXU
    acc_ref[...] += jnp.dot(a, w_ref[...], preferred_element_type=jnp.float32)

    @pl.when(k == pl.num_programs(2) - 1)
    def _store():
        o_ref[...] = (acc_ref[...] + b_ref[...]).astype(o_ref.dtype)


# ----------------------------------------------------------------------------- wrappers
def prepare_flatten_head(weight, bias, *, compute_dtype=jnp.bfloat16,
                         x_dtype=jnp.float32, out_dtype=None, max_tile_bytes=None):
    """One-time (init) prep: transpose + cast + pad the weight, build the tile plan."""
    T, nf = weight.shape
    out_dtype = jnp.dtype(out_dtype if out_dtype is not None else x_dtype)
    compute_dtype = jnp.dtype(compute_dtype)
    plan = _make_plan(nf, T,
                      x_itemsize=jnp.dtype(x_dtype).itemsize,
                      w_itemsize=compute_dtype.itemsize,
                      out_itemsize=out_dtype.itemsize,
                      max_tile_bytes=max_tile_bytes)
    w_t = weight.T.astype(compute_dtype)                                 # [nf, T]
    w_t = jnp.pad(w_t, ((0, plan["nf_pad"] - nf), (0, plan["Tp"] - T)))  # zero pad K/N
    b2d = jnp.pad(bias.astype(jnp.float32), (0, plan["Tp"] - T)).reshape(1, plan["Tp"])
    return dict(w_t=w_t, b=b2d, plan=plan, T=T, nf=nf,
                compute_dtype=compute_dtype, out_dtype=out_dtype)


def flatten_head_apply(x, params):
    """x: [B, n_vars, d_model, patch_num] -> [B, n_vars, target_window]."""
    B, n_vars, d_model, patch_num = x.shape
    nf = d_model * patch_num
    assert nf == params["nf"], "nf mismatch between input and prepared weight"
    plan, T = params["plan"], params["T"]
    tk, tn = plan["tk"], plan["tn"]
    k_tiles, n_tiles, nf_pad, Tp = plan["k_tiles"], plan["n_tiles"], plan["nf_pad"], plan["Tp"]

    # ---- Row tiling: never split M just to feed cores; cap tm at 256.
    M = B * n_vars
    M8 = _round_up(M, 8)
    tm = min(M8, plan["tm_cap"])
    m_tiles = _cdiv(M8, tm)
    M_pad = m_tiles * tm

    # ---- Layout plumbing (flatten is a bitcast; pad only when actually needed).
    x2d = x.reshape(M, nf)
    if (M_pad - M) or (nf_pad - nf):
        x2d = jnp.pad(x2d, ((0, M_pad - M), (0, nf_pad - nf)))

    # Grid-constant blocks get a single buffer; streamed blocks keep double buffering.
    w_mode = pl.Buffered(1) if (n_tiles == 1 and k_tiles == 1) else None
    b_mode = pl.Buffered(1) if n_tiles == 1 else None

    footprint = _tile_footprint(tm, tk, tn, k_tiles, n_tiles,
                                x2d.dtype.itemsize,
                                params["w_t"].dtype.itemsize,
                                params["out_dtype"].itemsize)
    vmem_limit = min(int(plan["vmem_cap"]) - (4 << 20),
                     max(footprint + (8 << 20), 32 << 20))
    vmem_limit = max(vmem_limit, footprint + (2 << 20))

    cost = pl.CostEstimate(
        flops=2 * M * nf * T,
        transcendentals=0,
        bytes_accessed=int(M_pad * nf_pad * x2d.dtype.itemsize
                           + nf_pad * Tp * params["w_t"].dtype.itemsize
                           + M_pad * Tp * params["out_dtype"].itemsize),
    )

    kernel = functools.partial(_flatten_head_kernel,
                               compute_dtype=params["compute_dtype"])

    out2d = pl.pallas_call(
        kernel,
        out_shape=jax.ShapeDtypeStruct((M_pad, Tp), params["out_dtype"]),
        grid_spec=pltpu.PrefetchScalarGridSpec(
            num_scalar_prefetch=0,
            # N outer, M middle, K inner: output block constant over K (accumulate);
            # for the common m_tiles==1 case the weight is streamed from HBM exactly once.
            grid=(n_tiles, m_tiles, k_tiles),
            in_specs=[
                pl.BlockSpec((tm, tk), lambda j, i, k: (i, k)),                  # x rows
                pl.BlockSpec((tk, tn), lambda j, i, k: (k, j), pipeline_mode=w_mode),  # W^T
                pl.BlockSpec((1, tn), lambda j, i, k: (0, j), pipeline_mode=b_mode),   # bias
            ],
            out_specs=pl.BlockSpec((tm, tn), lambda j, i, k: (i, j)),
            scratch_shapes=[pltpu.VMEM((tm, tn), jnp.float32)],
        ),
        compiler_params=pltpu.CompilerParams(
            dimension_semantics=("parallel", "parallel", "arbitrary"),
            vmem_limit_bytes=int(vmem_limit),
        ),
        cost_estimate=cost,
    )(x2d, params["w_t"], params["b"])

    # Dropout with p=0 (eval) is the identity — nothing to do.
    return out2d[:M, :T].reshape(B, n_vars, T)


def flatten_head(x, weight, bias, *, compute_dtype=jnp.bfloat16, max_tile_bytes=None):
    """Convenience one-shot path (prep should normally be hoisted to model init)."""
    params = prepare_flatten_head(weight, bias, compute_dtype=compute_dtype,
                                  x_dtype=x.dtype, max_tile_bytes=max_tile_bytes)
    return flatten_head_apply(x, params)


# ----------------------------------------------------------------------------- reference + tests
def flatten_head_ref(x, weight, bias, compute_dtype=None):
    B, n_vars, d_model, patch_num = x.shape
    x2d = x.reshape(B, n_vars, d_model * patch_num)
    if compute_dtype is not None and jnp.dtype(compute_dtype) != jnp.dtype(jnp.float32):
        x2d = x2d.astype(compute_dtype).astype(jnp.float32)
        weight = weight.astype(compute_dtype).astype(jnp.float32)
    return (jnp.einsum("bvn,tn->bvt", x2d, weight) + bias).astype(x.dtype)


def _run_case(key, B, n_vars, d_model, patch_num, target_window, *,
              compute_dtype, tol, max_tile_bytes=None):
    nf = d_model * patch_num
    kx, kw, kb = jax.random.split(key, 3)
    x = jax.random.normal(kx, (B, n_vars, d_model, patch_num), dtype=jnp.float32)
    bound = 1.0 / float(nf) ** 0.5
    weight = jax.random.uniform(kw, (target_window, nf), jnp.float32, -bound, bound)
    bias = jax.random.uniform(kb, (target_window,), jnp.float32, -bound, bound)

    params = prepare_flatten_head(weight, bias, compute_dtype=compute_dtype,
                                  x_dtype=x.dtype, max_tile_bytes=max_tile_bytes)
    out = flatten_head_apply(x, params)
    jax.block_until_ready(out)

    cd = None if jnp.dtype(compute_dtype) == jnp.dtype(jnp.float32) else compute_dtype
    ref = flatten_head_ref(x, weight, bias, cd)
    assert out.shape == (B, n_vars, target_window)
    assert jnp.allclose(out, ref, atol=tol, rtol=tol), \
        f"max abs err {float(jnp.max(jnp.abs(out - ref)))}"


if __name__ == "__main__":
    key = jax.random.PRNGKey(0)
    k1, k2, k3 = jax.random.split(key, 3)

    # f32 compute path, trivial grid (1,1,1), tight tolerance.
    _run_case(k1, B=2, n_vars=4, d_model=16, patch_num=8, target_window=32,
              compute_dtype=jnp.float32, tol=1e-5)

    # bf16 MXU path + awkward shapes: M = 21 (row pad) and T = 96 (column pad to 128).
    _run_case(k2, B=3, n_vars=7, d_model=16, patch_num=8, target_window=96,
              compute_dtype=jnp.bfloat16, tol=2e-3)

    # Force the streamed path (grid (n=3, m=1, k=2)) by shrinking the tile budget:
    # exercises K-tiling with the f32 accumulator and multiple column tiles.
    _run_case(k3, B=2, n_vars=4, d_model=32, patch_num=8, target_window=384,
              compute_dtype=jnp.bfloat16, tol=2e-3, max_tile_bytes=900 * 1024)

    print("KERNEL_OK")
</pallas_src>

<mosaic_0001>
module attributes {stable_mosaic.version = 11 : i64} {
  func.func @_flatten_head_kernel(%arg0: i32, %arg1: i32, %arg2: i32, %arg3: memref<8x128xf32, #tpu.memory_space<vmem>>, %arg4: memref<128x128xf32, #tpu.memory_space<vmem>>, %arg5: memref<1x128xf32, #tpu.memory_space<vmem>>, %arg6: memref<8x128xf32, #tpu.memory_space<vmem>>, %arg7: memref<8x128xf32, #tpu.memory_space<vmem>>) attributes {dimension_semantics = [#tpu.dimension_semantics<parallel>, #tpu.dimension_semantics<parallel>, #tpu.dimension_semantics<arbitrary>], iteration_bounds = array<i64: 1, 1, 1>, scalar_prefetch = 0 : i64, scratch_operands = 1 : i64, tpu.core_type = #tpu.core_type<tc>, window_params = [{transform_indices = @transform_0, window_bounds = array<i64: 8, 128>}, {pipeline_mode = #tpu.pipeline_mode<synchronous>, transform_indices = @transform_1, window_bounds = array<i64: 128, 128>}, {pipeline_mode = #tpu.pipeline_mode<synchronous>, transform_indices = @transform_2, window_bounds = array<i64: 1, 128>}, {transform_indices = @transform_3, window_bounds = array<i64: 8, 128>}]} {
    %c0_i32 = arith.constant 0 : i32
    %0 = arith.cmpi eq, %arg2, %c0_i32 : i32
    %1 = arith.extui %0 : i1 to i32
    %c0_i32_0 = arith.constant 0 : i32
    %2 = arith.cmpi ne, %1, %c0_i32_0 : i32
    scf.if %2 {
      %cst_10 = arith.constant 0.000000e+00 : f32
      %12 = vector.broadcast %cst_10 : f32 to vector<8x128xf32>
      %c0_11 = arith.constant 0 : index
      %c0_12 = arith.constant 0 : index
      %13 = vector.load %arg7[%c0_11, %c0_12] : memref<8x128xf32, #tpu.memory_space<vmem>>, vector<8x128xf32>
      tpu.vector_store %arg7[%c0_11, %c0_12], %12 {strides = array<i32>} : memref<8x128xf32, #tpu.memory_space<vmem>>, vector<8x128xf32>,
    } else {
    }
    %c0 = arith.constant 0 : index
    %c0_1 = arith.constant 0 : index
    %3 = vector.load %arg3[%c0, %c0_1] : memref<8x128xf32, #tpu.memory_space<vmem>>, vector<8x128xf32>
    %c0_2 = arith.constant 0 : index
    %c0_3 = arith.constant 0 : index
    %4 = vector.load %arg7[%c0_2, %c0_3] : memref<8x128xf32, #tpu.memory_space<vmem>>, vector<8x128xf32>
    %c0_4 = arith.constant 0 : index
    %c0_5 = arith.constant 0 : index
    %5 = vector.load %arg4[%c0_4, %c0_5] : memref<128x128xf32, #tpu.memory_space<vmem>>, vector<128x128xf32>
    %cst = arith.constant dense<0.000000e+00> : vector<8x128xf32>
    %6 = tpu.matmul %3, %5, %cst {dimension_numbers = #tpu.dot_dimension_numbers<[1], [0], [0], [1], [0, 0, 1, 1], [], []>} : vector<8x128xf32>, vector<128x128xf32>, vector<8x128xf32> -> vector<8x128xf32>
    %7 = arith.addf %4, %6 : vector<8x128xf32>
    %c0_6 = arith.constant 0 : index
    %c0_7 = arith.constant 0 : index
    %8 = vector.load %arg7[%c0_6, %c0_7] : memref<8x128xf32, #tpu.memory_space<vmem>>, vector<8x128xf32>
    tpu.vector_store %arg7[%c0_6, %c0_7], %7 {strides = array<i32>} : memref<8x128xf32, #tpu.memory_space<vmem>>, vector<8x128xf32>,
    %c0_i32_8 = arith.constant 0 : i32
    %9 = arith.cmpi eq, %arg2, %c0_i32_8 : i32
    %10 = arith.extui %9 : i1 to i32
    %c0_i32_9 = arith.constant 0 : i32
    %11 = arith.cmpi ne, %10, %c0_i32_9 : i32
    scf.if %11 {
      %c0_10 = arith.constant 0 : index
      %c0_11 = arith.constant 0 : index
      %12 = vector.load %arg7[%c0_10, %c0_11] : memref<8x128xf32, #tpu.memory_space<vmem>>, vector<8x128xf32>
      %c0_12 = arith.constant 0 : index
      %c0_13 = arith.constant 0 : index
      %13 = vector.load %arg5[%c0_12, %c0_13] : memref<1x128xf32, #tpu.memory_space<vmem>>, vector<1x128xf32>
      %14 = vector.broadcast %13 : vector<1x128xf32> to vector<8x128xf32>
      %15 = arith.addf %12, %14 : vector<8x128xf32>
      %c0_14 = arith.constant 0 : index
      %c0_15 = arith.constant 0 : index
      %16 = vector.load %arg6[%c0_14, %c0_15] : memref<8x128xf32, #tpu.memory_space<vmem>>, vector<8x128xf32>
      tpu.vector_store %arg6[%c0_14, %c0_15], %15 {strides = array<i32>} : memref<8x128xf32, #tpu.memory_space<vmem>>, vector<8x128xf32>,
    } else {
    }
    return
  }
  func.func @transform_0(%arg0: i32, %arg1: i32, %arg2: i32) -> (i32, i32) {
    %c0_i32 = arith.constant 0 : i32
    return %arg1, %arg2 : i32, i32
  }
  func.func @transform_1(%arg0: i32, %arg1: i32, %arg2: i32) -> (i32, i32) {
    %c0_i32 = arith.constant 0 : i32
    return %arg2, %arg0 : i32, i32
  }
  func.func @transform_2(%arg0: i32, %arg1: i32, %arg2: i32) -> (i32, i32) {
    %c0_i32 = arith.constant 0 : i32
    %c0_i32_0 = arith.constant 0 : i32
    return %c0_i32, %arg0 : i32, i32
  }
  func.func @transform_3(%arg0: i32, %arg1: i32, %arg2: i32) -> (i32, i32) {
    %c0_i32 = arith.constant 0 : i32
    return %arg1, %arg0 : i32, i32
  }
}

</mosaic_0001>

<llo_original>
// kernel: tpu_custom_call.1
$region0: #{tpu_custom_call.1}
  #allocation0 [shape = 'u32[]', space=smem, size = 0x4, offset = 0x4, fixed_abs, tag = 'smem constant byte address 0x4 - core index']
  #allocation1 [shape = 'u32[144,128]{1,0:T(1,128)}', space=vmem, size = 0x12000, scoped, tag = 'internal scratch']
  #allocation2 [shape = 'f32[8,128]{1,0:T(8,128)}', space=vmem, size = 0x1000, scoped, tag = 'scratch operand']
  %s0 = inlined_call_operand.hbm [shape: f32[8,128], index: 0, kind: input, shape index: {}]
  %s1 = inlined_call_operand.hbm [shape: f32[128,128], index: 1, kind: input, shape index: {}]
  %s2 = inlined_call_operand.vmem [shape: f32[1,128], index: 2, kind: input, shape index: {}]
  %s3 = inlined_call_operand.hbm [shape: f32[8,128], index: 3, kind: output, shape index: {}]
  %s4 = sld [smem:[#allocation0]]
  $region38: #{tpu_custom_call.1} parent=0
    _
  %s6 = ssub.s32 1, %s4
  %s7 = scalar_select 0, %s6, %s4
  $region1: #{tpu_custom_call.1} parent=0
    #allocation3 [shape = 'u8[4096]{0}', space=vmem, size = 0x1000, scoped, tag = 'input window, operand 0, single buffered']
    #allocation4 [shape = 's32[1]{0}', space=sflag, size = 0x4, scoped, tag = 'scoped memory for tpu_custom_call.1']
    #allocation5 [shape = 's32[1]{0}', space=sflag, size = 0x4, scoped, tag = 'scoped memory for tpu_custom_call.1']
    #allocation6 [shape = 'u8[65536]{0}', space=vmem, size = 0x10000, scoped, tag = 'input window, operand 1, single buffered']
    #allocation7 [shape = 's32[1]{0}', space=sflag, size = 0x4, scoped, tag = 'scoped memory for tpu_custom_call.1']
    #allocation8 [shape = 'u8[4096]{0}', space=vmem, size = 0x1000, scoped, tag = 'output window, operand 0, single buffered']
    %8 = vsyncpa [#allocation4], 0
    %9 = vsyncpa [#allocation7], 0
    %10 = vsyncpa [#allocation5], 0
    // Predicated region
    $region2: #{tpu_custom_call.1} parent=1 // pred_check
      _
    $region3: #{tpu_custom_call.1} parent=1 // pred_check_branch
      %12 = sbr.rel (0) target = $region5
    $region4: #{tpu_custom_call.1} parent=1 // pred_region
      %s14 = ssub.s32 128, 128
      %15 = vsyncadd [#allocation4], %s14
      %s17 = sshll.u32 [#allocation3], 4
      %s18 = int_to_ptr.vmem [resolvable:$true] %s17
      %20 = dma.hbm_to_vmem [thread:$0]  %s0, 128, %s18, [#allocation4]
    $region5: #{tpu_custom_call.1} parent=1 // pred_fallthru
      _
    // Predicated region
    $region6: #{tpu_custom_call.1} parent=1 // pred_check
      _
    $region7: #{tpu_custom_call.1} parent=1 // pred_check_branch
      %22 = sbr.rel (0) target = $region9
    $region8: #{tpu_custom_call.1} parent=1 // pred_region
      %s24 = ssub.s32 2048, 2048
      %25 = vsyncadd [#allocation7], %s24
      %s26 = sshll.u32 [#allocation6], 4
      %s27 = int_to_ptr.vmem [resolvable:$true] %s26
      %32 = dma.hbm_to_vmem [thread:$0]  %s1, 2048, %s27, [#allocation7], 128, 128, 8
    $region9: #{tpu_custom_call.1} parent=1 // pred_fallthru
      _
    // Predicated region
    $region10: #{tpu_custom_call.1} parent=1 // pred_check
      _
    $region11: #{tpu_custom_call.1} parent=1 // pred_check_branch
      %34 = sbr.rel (0) target = $region13
    $region12: #{tpu_custom_call.1} parent=1 // pred_region
      _
    $region13: #{tpu_custom_call.1} parent=1 // pred_fallthru
      _
    // Predicated region
    $region14: #{tpu_custom_call.1} parent=1 // pred_check
      _
    $region15: #{tpu_custom_call.1} parent=1 // pred_check_branch
      %36 = sbr.rel (0) target = $region17
    $region16: #{tpu_custom_call.1} parent=1 // pred_region
      %37 = dma.done [#allocation4], 128
    $region17: #{tpu_custom_call.1} parent=1 // pred_fallthru
      _
    // Predicated region
    $region18: #{tpu_custom_call.1} parent=1 // pred_check
      _
    $region19: #{tpu_custom_call.1} parent=1 // pred_check_branch
      %39 = sbr.rel (0) target = $region21
    $region20: #{tpu_custom_call.1} parent=1 // pred_region
      %40 = dma.done [#allocation7], 2048
    $region21: #{tpu_custom_call.1} parent=1 // pred_fallthru
      _
    %p41 = scmp.eq.s32.totalorder 0, 0
    // Predicated region
    $region22: #{tpu_custom_call.1} parent=1 // pred_check
      %p42 = pneg %p41
    $region23: #{tpu_custom_call.1} parent=1 // pred_check_branch
      %44 = sbr.rel (%p42) target = $region25
    $region24: #{tpu_custom_call.1} parent=1 // pred_region
      %45 = vst [vmem:[#allocation2] sm:$0xff] 0.0
    $region25: #{tpu_custom_call.1} parent=1 // pred_fallthru
      _
    %v46 = vld [vmem:[#allocation3] sm:$0xff]
    %v47 = vld [vmem:[#allocation2] sm:$0xff]
    %v48 = vld [vmem:[#allocation6] sm:$0xff]
    %v49 = vld [vmem:[#allocation6 + $0x8] sm:$0xff]
    %v50 = vld [vmem:[#allocation6 + $0x10] sm:$0xff]
    %v51 = vld [vmem:[#allocation6 + $0x18] sm:$0xff]
    %v52 = vld [vmem:[#allocation6 + $0x20] sm:$0xff]
    %v53 = vld [vmem:[#allocation6 + $0x28] sm:$0xff]
    %v54 = vld [vmem:[#allocation6 + $0x30] sm:$0xff]
    %v55 = vld [vmem:[#allocation6 + $0x38] sm:$0xff]
    %v56 = vld [vmem:[#allocation6 + $0x40] sm:$0xff]
    %v57 = vld [vmem:[#allocation6 + $0x48] sm:$0xff]
    %v58 = vld [vmem:[#allocation6 + $0x50] sm:$0xff]
    %v59 = vld [vmem:[#allocation6 + $0x58] sm:$0xff]
    %v60 = vld [vmem:[#allocation6 + $0x60] sm:$0xff]
    %v61 = vld [vmem:[#allocation6 + $0x68] sm:$0xff]
    %v62 = vld [vmem:[#allocation6 + $0x70] sm:$0xff]
    %v63 = vld [vmem:[#allocation6 + $0x78] sm:$0xff]
    %64 = vmatprep.subr.mxu0 0.0
    %65 = vmatpush1.msra.mxu0 %v48
    %66 = vmatprep.subr.mxu0 0.0
    %67 = vmatpush1.msra.mxu0 %v49
    %68 = vmatprep.subr.mxu0 0.0
    %69 = vmatpush1.msra.mxu0 %v50
    %70 = vmatprep.subr.mxu0 0.0
    %71 = vmatpush1.msra.mxu0 %v51
    %72 = vmatprep.subr.mxu0 0.0
    %73 = vmatpush1.msra.mxu0 %v52
    %74 = vmatprep.subr.mxu0 0.0
    %75 = vmatpush1.msra.mxu0 %v53
    %76 = vmatprep.subr.mxu0 0.0
    %77 = vmatpush1.msra.mxu0 %v54
    %78 = vmatprep.subr.mxu0 0.0
    %79 = vmatpush1.msra.mxu0 %v55
    %80 = vmatprep.subr.mxu0 0.0
    %81 = vmatpush1.msra.mxu0 %v56
    %82 = vmatprep.subr.mxu0 0.0
    %83 = vmatpush1.msra.mxu0 %v57
    %84 = vmatprep.subr.mxu0 0.0
    %85 = vmatpush1.msra.mxu0 %v58
    %86 = vmatprep.subr.mxu0 0.0
    %87 = vmatpush1.msra.mxu0 %v59
    %88 = vmatprep.subr.mxu0 0.0
    %89 = vmatpush1.msra.mxu0 %v60
    %90 = vmatprep.subr.mxu0 0.0
    %91 = vmatpush1.msra.mxu0 %v61
    %92 = vmatprep.subr.mxu0 0.0
    %93 = vmatpush1.msra.mxu0 %v62
    %94 = vmatprep.subr.mxu0 0.0
    %95 = vmatpush1.msra.mxu0 %v63
    %96 = vmatprep.subr.mxu0 0.0
    %97 = vmatpush1.msra.mxu0 0.0
    %98 = vmatprep.subr.mxu0 0.0
    %99 = vmatpush1.msra.mxu0 0.0
    %100 = vmatprep.subr.mxu0 0.0
    %101 = vmatpush1.msra.mxu0 0.0
    %102 = vmatprep.subr.mxu0 0.0
    %103 = vmatpush1.msra.mxu0 0.0
    %104 = vmatprep.subr.mxu0 0.0
    %105 = vmatpush1.msra.mxu0 0.0
    %106 = vmatprep.subr.mxu0 0.0
    %107 = vmatpush1.msra.mxu0 0.0
    %108 = vmatprep.subr.mxu0 0.0
    %109 = vmatpush1.msra.mxu0 0.0
    %110 = vmatprep.subr.mxu0 0.0
    %111 = vmatpush1.msra.mxu0 0.0
    %112 = vmatprep.subr.mxu0 0.0
    %113 = vmatpush1.msra.mxu0 0.0
    %114 = vmatprep.subr.mxu0 0.0
    %115 = vmatpush1.msra.mxu0 0.0
    %116 = vmatprep.subr.mxu0 0.0
    %117 = vmatpush1.msra.mxu0 0.0
    %118 = vmatprep.subr.mxu0 0.0
    %119 = vmatpush1.msra.mxu0 0.0
    %120 = vmatprep.subr.mxu0 0.0
    %121 = vmatpush1.msra.mxu0 0.0
    %122 = vmatprep.subr.mxu0 0.0
    %123 = vmatpush1.msra.mxu0 0.0
    %124 = vmatprep.subr.mxu0 0.0
    %125 = vmatpush1.msra.mxu0 0.0
    %126 = vmatprep.subr.mxu0 0.0
    %127 = vmatpush1.msra.mxu0 0.0
    %128 = vmatprep.mubr.f32.mxu0 0.0
    %129 = vmatmul.mubr.f32.gmra.mrb[0].mxu0 %v46
    %v130 = vpop.f32.mrb[0].mxu0
    %v131 = vadd.f32 0.0, %v130
    %v132 = vpop.f32.mrb[0].mxu0
    %133 = vdwg.mxu0
    %v134 = vadd.f32 %v47, %v131
    %135 = vst [vmem:[#allocation2] sm:$0xff] %v134
    // Predicated region
    $region26: #{tpu_custom_call.1} parent=1 // pred_check
      %p136 = pneg %p41
    $region27: #{tpu_custom_call.1} parent=1 // pred_check_branch
      %138 = sbr.rel (%p136) target = $region29
    $region28: #{tpu_custom_call.1} parent=1 // pred_region
      %v139 = vld [vmem:[#allocation2] sm:$0xff]
      %v140 = vld [vmem:[%s2] sm:$0x1]
      %v142 = vlaneseq
      %v143 = vshrl.u32 %v142, 7
      %v144 = vsub.s32 0, %v143
      %v145 = vrot.slane %v140, %v144
      %v147 = vadd.f32 %v139, %v145
      %148 = vst [vmem:[#allocation8] sm:$0xff] %v147
    $region29: #{tpu_custom_call.1} parent=1 // pred_fallthru
      _
    // Predicated region
    $region30: #{tpu_custom_call.1} parent=1 // pred_check
      _
    $region31: #{tpu_custom_call.1} parent=1 // pred_check_branch
      %150 = sbr.rel (0) target = $region33
    $region32: #{tpu_custom_call.1} parent=1 // pred_region
      %s152 = ssub.s32 128, 128
      %153 = vsyncadd [#allocation5], %s152
      %s155 = sshll.u32 [#allocation8], 4
      %s156 = int_to_ptr.vmem [resolvable:$true] %s155
      %158 = dma.vmem_to_hbm [thread:$0]  %s156, 128, %s3, [#allocation5]
    $region33: #{tpu_custom_call.1} parent=1 // pred_fallthru
      _
    // Predicated region
    $region34: #{tpu_custom_call.1} parent=1 // pred_check
      _
    $region35: #{tpu_custom_call.1} parent=1 // pred_check_branch
      %160 = sbr.rel (0) target = $region37
    $region36: #{tpu_custom_call.1} parent=1 // pred_region
      %161 = dma.done [#allocation5], 128
    $region37: #{tpu_custom_call.1} parent=1 // pred_fallthru
      _
    %162 = vsyncpa [#allocation4], 1
    %163 = vsyncpa [#allocation7], 1
    %164 = vsyncpa [#allocation5], 1

</llo_original>
